<compile_context>
chip_gen: v7x
topology: tpu7x:2x2x1
jax: 0.10.0
libtpu: 0.0.40
codegen_flags: <defaults>
</compile_context>

<pallas_src>
import jax
import jax.numpy as jnp
from jax.experimental import pallas as pl
from jax.experimental.pallas import tpu as pltpu

EPS = 1e-5  # nn.BatchNorm1d default eps


def _residual_mlp_kernel(x_ref, w1_ref, w2_ref, b_ref, o_ref):
    x = x_ref[...]                                                     # (bn, D)

    # Linear1 (+ folded BN1) + ReLU
    h = jnp.dot(x, w1_ref[...], preferred_element_type=jnp.float32) + b_ref[0:1, :]
    h = jnp.maximum(h, 0.0)

    # Dropout(p=0.25): identity in eval mode.

    # Linear2 (+ folded BN2)
    h = jnp.dot(h, w2_ref[...], preferred_element_type=jnp.float32) + b_ref[1:2, :]

    # residual add + ReLU
    o_ref[...] = jnp.maximum(x + h, 0.0).astype(o_ref.dtype)


def _round_up(a, b):
    return (a + b - 1) // b * b


def fold_bn_params(params):
    """Fold eval-mode BatchNorm1d into the Linear weights/biases (exact in f32).

    Call ONCE per set of weights (outside the per-forward path) — avoids re-doing
    the transpose + per-column scale on every inference call.
    """
    s1 = params["g1"] / jnp.sqrt(params["v1"] + EPS)                   # (D,)
    s2 = params["g2"] / jnp.sqrt(params["v2"] + EPS)
    # nn.Linear stores (out, in); kernel wants (in, out), scaled per output column.
    w1f = (params["w1"].T * s1[None, :]).astype(jnp.float32)           # (D, D)
    w2f = (params["w2"].T * s2[None, :]).astype(jnp.float32)
    b1f = (params["b1"] - params["m1"]) * s1 + params["be1"]
    b2f = (params["b2"] - params["m2"]) * s2 + params["be2"]
    bias = jnp.stack([b1f, b2f], axis=0).astype(jnp.float32)           # (2, D) — one DMA
    return dict(w1=w1f, w2=w2f, bias=bias)


def _vmem_cap_bytes():
    try:
        return int(pltpu.get_tpu_info().vmem_capacity_bytes)
    except Exception:
        return 64 * 1024 * 1024   # conservative: v7x per-TensorCore VMEM


def _const_spec(shape):
    """Grid-invariant operand: single-buffered (no point double-buffering constants)."""
    idx = lambda i: (0,) * len(shape)
    try:
        return pl.BlockSpec(shape, idx, pipeline_mode=pl.Buffered(1))
    except TypeError:  # older jax without pipeline_mode kwarg
        return pl.BlockSpec(shape, idx)


def residual_mlp_block(x, folded, *, block_n=4096):
    """x: (N, D) float32. folded: output of fold_bn_params()."""
    n, d = x.shape
    w1f, w2f, bias = folded["w1"], folded["w2"], folded["bias"]

    # ---- VMEM budget (hardware-aware) ----
    cap = _vmem_cap_bytes()
    budget = max(16 << 20, cap - (8 << 20))            # leave headroom (~56 MiB on v7x)
    const_bytes = 2 * d * d * 4 + 2 * d * 4            # weights + bias, single-buffered

    # ---- Batch tile: as large as the budget allows, capped by block_n ----
    bn_budget = max(8, (budget // 2 - const_bytes) // (2 * 2 * d * 4))
    bn = min(_round_up(block_n, 8), _round_up(bn_budget, 8))
    # >=2 grid steps when possible so the "parallel" axis can shard over v7x's 2 TCs.
    bn = min(bn, max(8, _round_up(pl.cdiv(n, 2), 8)))
    bn = max(8, bn)

    # Ragged batch: no wrapper-side pad/slice — Pallas masks the partial last block.
    # Safe because every output row depends only on its own input row.
    grid = pl.cdiv(n, bn)

    # double-buffered x/out tiles + single-buffered weights/bias
    need = 2 * 2 * bn * d * 4 + const_bytes
    vmem_limit = int(min(cap - (8 << 20), max(32 << 20, 2 * need)))
    vmem_limit = max(vmem_limit, min(cap, need + (2 << 20)))

    x_spec = pl.BlockSpec((bn, d), lambda i: (i, 0))
    w_spec = _const_spec((d, d))
    b_spec = _const_spec((2, d))

    return pl.pallas_call(
        _residual_mlp_kernel,
        out_shape=jax.ShapeDtypeStruct((n, d), x.dtype),
        grid_spec=pltpu.PrefetchScalarGridSpec(
            num_scalar_prefetch=0,
            grid=(grid,),
            in_specs=[x_spec, w_spec, w_spec, b_spec],
            out_specs=x_spec,
        ),
        compiler_params=pltpu.CompilerParams(
            dimension_semantics=("parallel",),
            vmem_limit_bytes=vmem_limit,
        ),
    )(x, w1f, w2f, bias)


def init_params(key, dim):
    """Deterministic init mirroring the PyTorch module's parameter shapes."""
    ks = jax.random.split(key, 8)
    bound = 1.0 / jnp.sqrt(dim)  # nn.Linear default init bound
    u = lambda k, shape: jax.random.uniform(k, shape, jnp.float32, -bound, bound)
    return dict(
        # Linear 1
        w1=u(ks[0], (dim, dim)), b1=u(ks[1], (dim,)),
        # BatchNorm1d 1 (perturbed from defaults to exercise the folding math)
        g1=1.0 + 0.1 * jax.random.normal(ks[2], (dim,), jnp.float32),
        be1=0.1 * jax.random.normal(ks[3], (dim,), jnp.float32),
        m1=0.05 * jax.random.normal(ks[4], (dim,), jnp.float32),
        v1=1.0 + 0.1 * jax.random.uniform(ks[5], (dim,), jnp.float32),
        # Linear 2
        w2=u(ks[6], (dim, dim)), b2=u(ks[7], (dim,)),
        # BatchNorm1d 2
        g2=jnp.ones((dim,), jnp.float32),
        be2=jnp.zeros((dim,), jnp.float32),
        m2=jnp.zeros((dim,), jnp.float32),
        v2=jnp.ones((dim,), jnp.float32),
    )


def reference(x, p):
    """Pure-JAX reference of the eval-mode forward pass (unfolded BN)."""
    h = x @ p["w1"].T + p["b1"]
    h = (h - p["m1"]) / jnp.sqrt(p["v1"] + EPS) * p["g1"] + p["be1"]
    h = jnp.maximum(h, 0.0)
    h = h @ p["w2"].T + p["b2"]
    h = (h - p["m2"]) / jnp.sqrt(p["v2"] + EPS) * p["g2"] + p["be2"]
    return jnp.maximum(x + h, 0.0)


if __name__ == "__main__":
    key = jax.random.PRNGKey(0)
    kx, kp = jax.random.split(key)

    batch, dim = 20, 128  # batch deliberately not a multiple of 8: exercises ragged last block
    x = jax.random.normal(kx, (batch, dim), jnp.float32)
    params = init_params(kp, dim)
    folded = fold_bn_params(params)   # BN folding done once, outside the forward path
    ref = reference(x, params)

    # Default (budget-derived) tile — clamps to >=2 grid steps, last block partial/masked.
    out = jax.block_until_ready(residual_mlp_block(x, folded))
    assert out.shape == (batch, dim)
    assert jnp.allclose(out, ref, atol=1e-4, rtol=1e-4), "mismatch vs reference (default tile)"

    # Small explicit tile — exercises a 3-step grid plus a partial (masked) last tile.
    out2 = jax.block_until_ready(residual_mlp_block(x, folded, block_n=8))
    assert jnp.allclose(out2, ref, atol=1e-4, rtol=1e-4), "mismatch vs reference (tiled grid)"

    print("KERNEL_OK")
</pallas_src>

<mosaic_0001>
module attributes {stable_mosaic.version = 11 : i64} {
  func.func @_residual_mlp_kernel(%arg0: i32, %arg1: memref<16x128xf32, #tpu.memory_space<vmem>>, %arg2: memref<128x128xf32, #tpu.memory_space<vmem>>, %arg3: memref<128x128xf32, #tpu.memory_space<vmem>>, %arg4: memref<2x128xf32, #tpu.memory_space<vmem>>, %arg5: memref<16x128xf32, #tpu.memory_space<vmem>>) attributes {dimension_semantics = [#tpu.dimension_semantics<parallel>], iteration_bounds = array<i64: 2>, scalar_prefetch = 0 : i64, scratch_operands = 0 : i64, tpu.core_type = #tpu.core_type<tc>, window_params = [{transform_indices = @transform_0, window_bounds = array<i64: 16, 128>}, {pipeline_mode = #tpu.pipeline_mode<synchronous>, transform_indices = @transform_1, window_bounds = array<i64: 128, 128>}, {pipeline_mode = #tpu.pipeline_mode<synchronous>, transform_indices = @transform_2, window_bounds = array<i64: 128, 128>}, {pipeline_mode = #tpu.pipeline_mode<synchronous>, transform_indices = @transform_3, window_bounds = array<i64: 2, 128>}, {transform_indices = @transform_4, window_bounds = array<i64: 16, 128>}]} {
    %c0 = arith.constant 0 : index
    %c0_0 = arith.constant 0 : index
    %0 = vector.load %arg1[%c0, %c0_0] : memref<16x128xf32, #tpu.memory_space<vmem>>, vector<16x128xf32>
    %c0_1 = arith.constant 0 : index
    %c0_2 = arith.constant 0 : index
    %1 = vector.load %arg2[%c0_1, %c0_2] : memref<128x128xf32, #tpu.memory_space<vmem>>, vector<128x128xf32>
    %cst = arith.constant dense<0.000000e+00> : vector<16x128xf32>
    %2 = tpu.matmul %0, %1, %cst {dimension_numbers = #tpu.dot_dimension_numbers<[1], [0], [0], [1], [0, 0, 1, 1], [], []>} : vector<16x128xf32>, vector<128x128xf32>, vector<16x128xf32> -> vector<16x128xf32>
    %c0_3 = arith.constant 0 : index
    %c0_4 = arith.constant 0 : index
    %3 = vector.load %arg4[%c0_3, %c0_4] : memref<2x128xf32, #tpu.memory_space<vmem>>, vector<1x128xf32>
    %4 = vector.broadcast %3 : vector<1x128xf32> to vector<16x128xf32>
    %5 = arith.addf %2, %4 : vector<16x128xf32>
    %cst_5 = arith.constant 0.000000e+00 : f32
    %6 = vector.broadcast %cst_5 : f32 to vector<16x128xf32>
    %7 = arith.maximumf %5, %6 : vector<16x128xf32>
    %c0_6 = arith.constant 0 : index
    %c0_7 = arith.constant 0 : index
    %8 = vector.load %arg3[%c0_6, %c0_7] : memref<128x128xf32, #tpu.memory_space<vmem>>, vector<128x128xf32>
    %cst_8 = arith.constant dense<0.000000e+00> : vector<16x128xf32>
    %9 = tpu.matmul %7, %8, %cst_8 {dimension_numbers = #tpu.dot_dimension_numbers<[1], [0], [0], [1], [0, 0, 1, 1], [], []>} : vector<16x128xf32>, vector<128x128xf32>, vector<16x128xf32> -> vector<16x128xf32>
    %c1 = arith.constant 1 : index
    %c0_9 = arith.constant 0 : index
    %10 = vector.load %arg4[%c1, %c0_9] : memref<2x128xf32, #tpu.memory_space<vmem>>, vector<1x128xf32>
    %11 = vector.broadcast %10 : vector<1x128xf32> to vector<16x128xf32>
    %12 = arith.addf %9, %11 : vector<16x128xf32>
    %13 = arith.addf %0, %12 : vector<16x128xf32>
    %cst_10 = arith.constant 0.000000e+00 : f32
    %14 = vector.broadcast %cst_10 : f32 to vector<16x128xf32>
    %15 = arith.maximumf %13, %14 : vector<16x128xf32>
    %c0_11 = arith.constant 0 : index
    %c0_12 = arith.constant 0 : index
    %16 = vector.load %arg5[%c0_11, %c0_12] : memref<16x128xf32, #tpu.memory_space<vmem>>, vector<16x128xf32>
    tpu.vector_store %arg5[%c0_11, %c0_12], %15 {strides = array<i32>} : memref<16x128xf32, #tpu.memory_space<vmem>>, vector<16x128xf32>,
    return
  }
  func.func @transform_0(%arg0: i32) -> (i32, i32) {
    %c0_i32 = arith.constant 0 : i32
    %c0_i32_0 = arith.constant 0 : i32
    return %arg0, %c0_i32 : i32, i32
  }
  func.func @transform_1(%arg0: i32) -> (i32, i32) {
    %c0_i32 = arith.constant 0 : i32
    %c0_i32_0 = arith.constant 0 : i32
    %c0_i32_1 = arith.constant 0 : i32
    return %c0_i32, %c0_i32_0 : i32, i32
  }
  func.func @transform_2(%arg0: i32) -> (i32, i32) {
    %c0_i32 = arith.constant 0 : i32
    %c0_i32_0 = arith.constant 0 : i32
    %c0_i32_1 = arith.constant 0 : i32
    return %c0_i32, %c0_i32_0 : i32, i32
  }
  func.func @transform_3(%arg0: i32) -> (i32, i32) {
    %c0_i32 = arith.constant 0 : i32
    %c0_i32_0 = arith.constant 0 : i32
    %c0_i32_1 = arith.constant 0 : i32
    return %c0_i32, %c0_i32_0 : i32, i32
  }
  func.func @transform_4(%arg0: i32) -> (i32, i32) {
    %c0_i32 = arith.constant 0 : i32
    %c0_i32_0 = arith.constant 0 : i32
    return %arg0, %c0_i32 : i32, i32
  }
}

</mosaic_0001>

<llo_original>
// kernel: tpu_custom_call.1
$region0: #{tpu_custom_call.1}
  #allocation0 [shape = 'u32[]', space=smem, size = 0x4, offset = 0x4, fixed_abs, tag = 'smem constant byte address 0x4 - core index']
  #allocation1 [shape = 'u32[144,128]{1,0:T(1,128)}', space=vmem, size = 0x12000, scoped, tag = 'internal scratch']
  %s0 = inlined_call_operand.hbm [shape: f32[20,128], index: 0, kind: input, shape index: {}]
  %s1 = inlined_call_operand.hbm [shape: f32[128,128], index: 1, kind: input, shape index: {}]
  %s2 = inlined_call_operand.hbm [shape: f32[128,128], index: 2, kind: input, shape index: {}]
  %s3 = inlined_call_operand.vmem [shape: f32[2,128], index: 3, kind: input, shape index: {}]
  %s4 = inlined_call_operand.hbm [shape: f32[20,128], index: 4, kind: output, shape index: {}]
  %s5 = sld [smem:[#allocation0]]
  $region61: #{tpu_custom_call.1} parent=0
    _
  %s7 = ssub.s32 1, %s5
  %s8 = scalar_select 0, %s7, %s5
  $region1: #{tpu_custom_call.1} parent=0
    #allocation2 [shape = 'u8[16384]{0}', space=vmem, size = 0x4000, scoped, tag = 'input window, operand 0']
    #allocation3 [shape = 's32[2]{0}', space=sflag, size = 0x8, scoped, tag = 'scoped memory for tpu_custom_call.1']
    #allocation4 [shape = 's32[2]{0}', space=sflag, size = 0x8, scoped, tag = 'scoped memory for tpu_custom_call.1']
    #allocation5 [shape = 'u8[65536]{0}', space=vmem, size = 0x10000, scoped, tag = 'input window, operand 1, single buffered']
    #allocation6 [shape = 's32[1]{0}', space=sflag, size = 0x4, scoped, tag = 'scoped memory for tpu_custom_call.1']
    #allocation7 [shape = 'u8[65536]{0}', space=vmem, size = 0x10000, scoped, tag = 'input window, operand 2, single buffered']
    #allocation8 [shape = 'u8[16384]{0}', space=vmem, size = 0x4000, scoped, tag = 'output window, operand 0']
    %9 = vsyncpa [#allocation3], 0
    %s10 = scalar_lea.sflag [#allocation3], 1
    %11 = vsyncpa %s10, 0
    %12 = vsyncpa [#allocation6], 0
    %13 = vsyncpa [#allocation4], 0
    %s14 = scalar_lea.sflag [#allocation4], 1
    %15 = vsyncpa %s14, 0
    loop: start=0, step=1, limit=4
    $region2: #{tpu_custom_call.1} parent=1 // loop_pre_header
      _
    $region3: #{tpu_custom_call.1} parent=1 // loop_header
      %s17 = sphi 0, %s21
      %p18 = scmp.ge.s32.totalorder %s17, 4
      %s27 = sphi 0, %s29
      %s30 = sphi 0, %s27
      %s31 = sphi 0, %s30
      %s47 = sphi 0, %s31
      %s51 = sphi 0, %s51
      %s53 = sphi 0, %s51
      %s54 = sphi 0, %s53
      %s68 = sphi 0, %s54
      %s72 = sphi 0, %s72
      %s74 = sphi 0, %s72
      %s75 = sphi 0, %s74
      %s89 = sphi 0, %s75
      %s93 = sphi 0, %s93
      %s95 = sphi 0, %s93
      %s96 = sphi 0, %s95
      %s110 = sphi 0, %s96
      %s116 = sphi 0, %s118
      %s119 = sphi 0, %s116
      %s120 = sphi 0, %s119
      %s136 = sphi 0, %s120
    $region4: #{tpu_custom_call.1} parent=1 // loop_header_branch
      %20 = sbr.rel (%p18) target = $region8
    $region5: #{tpu_custom_call.1} parent=1 // loop_body
      %s22 = ssub.s32 %s17, 1
      %s23 = ssub.s32 %s17, 2
      %s24 = sadd.s32 %s17, 1
      %s25 = ssub.s32 %s17, %s24
      %p26 = scmp.eq.s32.totalorder %s25, 0
      %s28 = sadd.s32 %s27, 1
      %s29 = scalar_select %p26, %s27, %s28
      %p32 = pneg %p26
      %p33 = scmp.eq.s32.totalorder %s17, 1
      %p34 = por %p32, %p33
      %p35 = scmp.ne.s32.totalorder %s27, %s30
      %p36 = scmp.eq.s32.totalorder %s17, 0
      %p37 = por %p35, %p36
      %p38 = scmp.ne.s32.totalorder %s27, %s30
      %p39 = scmp.eq.s32.totalorder %s22, 1
      %p40 = por %p38, %p39
      %p41 = scmp.ne.s32.totalorder %s30, %s31
      %p42 = scmp.eq.s32.totalorder %s22, 0
      %p43 = por %p41, %p42
      %p44 = scmp.ne.s32.totalorder %s30, %s31
      %p45 = scmp.eq.s32.totalorder %s23, 1
      %p46 = por %p44, %p45
      %p48 = scmp.ne.s32.totalorder %s31, %s47
      %p49 = scmp.eq.s32.totalorder %s23, 0
      %p50 = por %p48, %p49
      %s52 = sadd.s32 %s51, 1
      %p55 = scmp.eq.s32.totalorder %s17, 1
      %p56 = scmp.ne.s32.totalorder %s51, %s53
      %p57 = scmp.eq.s32.totalorder %s17, 0
      %p58 = por %p56, %p57
      %p59 = scmp.ne.s32.totalorder %s51, %s53
      %p60 = scmp.eq.s32.totalorder %s22, 1
      %p61 = por %p59, %p60
      %p62 = scmp.ne.s32.totalorder %s53, %s54
      %p63 = scmp.eq.s32.totalorder %s22, 0
      %p64 = por %p62, %p63
      %p65 = scmp.ne.s32.totalorder %s53, %s54
      %p66 = scmp.eq.s32.totalorder %s23, 1
      %p67 = por %p65, %p66
      %p69 = scmp.ne.s32.totalorder %s54, %s68
      %p70 = scmp.eq.s32.totalorder %s23, 0
      %p71 = por %p69, %p70
      %s73 = sadd.s32 %s72, 1
      %p76 = scmp.eq.s32.totalorder %s17, 1
      %p77 = scmp.ne.s32.totalorder %s72, %s74
      %p78 = scmp.eq.s32.totalorder %s17, 0
      %p79 = por %p77, %p78
      %p80 = scmp.ne.s32.totalorder %s72, %s74
      %p81 = scmp.eq.s32.totalorder %s22, 1
      %p82 = por %p80, %p81
      %p83 = scmp.ne.s32.totalorder %s74, %s75
      %p84 = scmp.eq.s32.totalorder %s22, 0
      %p85 = por %p83, %p84
      %p86 = scmp.ne.s32.totalorder %s74, %s75
      %p87 = scmp.eq.s32.totalorder %s23, 1
      %p88 = por %p86, %p87
      %p90 = scmp.ne.s32.totalorder %s75, %s89
      %p91 = scmp.eq.s32.totalorder %s23, 0
      %p92 = por %p90, %p91
      %s94 = sadd.s32 %s93, 1
      %p97 = scmp.eq.s32.totalorder %s17, 1
      %p98 = scmp.ne.s32.totalorder %s93, %s95
      %p99 = scmp.eq.s32.totalorder %s17, 0
      %p100 = por %p98, %p99
      %p101 = scmp.ne.s32.totalorder %s93, %s95
      %p102 = scmp.eq.s32.totalorder %s22, 1
      %p103 = por %p101, %p102
      %p104 = scmp.ne.s32.totalorder %s95, %s96
      %p105 = scmp.eq.s32.totalorder %s22, 0
      %p106 = por %p104, %p105
      %p107 = scmp.ne.s32.totalorder %s95, %s96
      %p108 = scmp.eq.s32.totalorder %s23, 1
      %p109 = por %p107, %p108
      %p111 = scmp.ne.s32.totalorder %s96, %s110
      %p112 = scmp.eq.s32.totalorder %s23, 0
      %p113 = por %p111, %p112
      %s114 = ssub.s32 %s17, %s24
      %p115 = scmp.eq.s32.totalorder %s114, 0
      %s117 = sadd.s32 %s116, 1
      %s118 = scalar_select %p115, %s116, %s117
      %p121 = pneg %p115
      %p122 = scmp.eq.s32.totalorder %s17, 1
      %p123 = por %p121, %p122
      %p124 = scmp.ne.s32.totalorder %s116, %s119
      %p125 = scmp.eq.s32.totalorder %s17, 0
      %p126 = por %p124, %p125
      %p127 = scmp.ne.s32.totalorder %s116, %s119
      %p128 = scmp.eq.s32.totalorder %s22, 1
      %p129 = por %p127, %p128
      %p130 = scmp.ne.s32.totalorder %s119, %s120
      %p131 = scmp.eq.s32.totalorder %s22, 0
      %p132 = por %p130, %p131
      %p133 = scmp.ne.s32.totalorder %s119, %s120
      %p134 = scmp.eq.s32.totalorder %s23, 1
      %p135 = por %p133, %p134
      %p137 = scmp.ne.s32.totalorder %s120, %s136
      %p138 = scmp.eq.s32.totalorder %s23, 0
      %p139 = por %p137, %p138
      %p140 = scmp.le.s32.totalorder 1, %s17
      %p141 = scmp.lt.s32.totalorder %s17, 3
      %p142 = pnand %p140, %p141
      %p143 = pneg %p142
      // Predicated region
      $region9: #{tpu_custom_call.1} parent=5 // pred_check
        _
      $region10: #{tpu_custom_call.1} parent=5 // pred_check_branch
        %145 = sbr.rel (%p142) target = $region12
      $region11: #{tpu_custom_call.1} parent=5 // pred_region
        %s146 = ssub.s32 %s17, 1
        // Predicated region
        $region13: #{tpu_custom_call.1} parent=11 // pred_check
          %p147 = pneg %p64
        $region14: #{tpu_custom_call.1} parent=11 // pred_check_branch
          %149 = sbr.rel (%p147) target = $region16
        $region15: #{tpu_custom_call.1} parent=11 // pred_region
          %s151 = ssub.s32 2048, 2048
          %152 = vsyncadd [#allocation6], %s151
          %s153 = sshll.u32 [#allocation5], 4
          %s154 = int_to_ptr.vmem [resolvable:$true] %s153
          %159 = dma.hbm_to_vmem [thread:$0]  %s1, 2048, %s154, [#allocation6], 128, 128, 8
        $region16: #{tpu_custom_call.1} parent=11 // pred_fallthru
          _
        // Predicated region
        $region17: #{tpu_custom_call.1} parent=11 // pred_check
          %p160 = pneg %p85
        $region18: #{tpu_custom_call.1} parent=11 // pred_check_branch
          %162 = sbr.rel (%p160) target = $region20
        $region19: #{tpu_custom_call.1} parent=11 // pred_region
          %s164 = ssub.s32 2048, 2048
          %165 = vsyncadd [#allocation6], %s164
          %s166 = sshll.u32 [#allocation7], 4
          %s167 = int_to_ptr.vmem [resolvable:$true] %s166
          %172 = dma.hbm_to_vmem [thread:$0]  %s2, 2048, %s167, [#allocation6], 128, 128, 8
        $region20: #{tpu_custom_call.1} parent=11 // pred_fallthru
          _
        // Predicated region
        $region21: #{tpu_custom_call.1} parent=11 // pred_check
          %p173 = pneg %p106
        $region22: #{tpu_custom_call.1} parent=11 // pred_check_branch
          %175 = sbr.rel (%p173) target = $region24
        $region23: #{tpu_custom_call.1} parent=11 // pred_region
          _
        $region24: #{tpu_custom_call.1} parent=11 // pred_fallthru
          _
      $region12: #{tpu_custom_call.1} parent=5 // pred_fallthru
        _
      %p176 = scmp.lt.s32.totalorder %s17, 2
      // Predicated region
      $region25: #{tpu_custom_call.1} parent=5 // pred_check
        %p177 = pneg %p176
      $region26: #{tpu_custom_call.1} parent=5 // pred_check_branch
        %179 = sbr.rel (%p177) target = $region28
      $region27: #{tpu_custom_call.1} parent=5 // pred_region
        // Predicated region
        $region29: #{tpu_custom_call.1} parent=27 // pred_check
          %p180 = pneg %p37
        $region30: #{tpu_custom_call.1} parent=27 // pred_check_branch
          %182 = sbr.rel (%p180) target = $region32
        $region31: #{tpu_custom_call.1} parent=27 // pred_region
          %s183 = sand.u32 %s27, 1
          %s184 = scalar_lea.sflag [#allocation3], %s183
          %s185 = sand.u32 %s27, 1
          %s186 = smul.addr %s185, 16
          %s187 = scalar_lea.vmem [#allocation2], %s186
          %s188 = smul.u32 2, %s17
          %s189 = ssub.s32 3, %s188
          %p190 = scmp.lt.s32.totalorder %s189, 2
          %s191 = scalar_select %p190, %s189, 2
          %s192 = smul.u32 128, %s191
          %s194 = ssub.s32 256, %s192
          %195 = vsyncadd %s184, %s194
          %p196 = scmp.ne.s32.totalorder 0, %s192
          %s197 = smul.addr %s188, 128
          %s198 = scalar_lea.hbm %s0, %s197
          %s199 = smul.u32 8, %s191
          %s200 = sshll.u32 %s187, 4
          %s201 = int_to_ptr.vmem [resolvable:$true] %s200
          %s202 = sshll.u32 %s199, 4
          %206 = dma.hbm_to_vmem [thread:$0]  (%p196), %s198, %s202, %s201, %s184, 128, 128, 8
        $region32: #{tpu_custom_call.1} parent=27 // pred_fallthru
          _
      $region28: #{tpu_custom_call.1} parent=5 // pred_fallthru
        _
      %p207 = scmp.le.s32.totalorder 1, %s17
      %p208 = scmp.lt.s32.totalorder %s17, 3
      %p209 = pnand %p207, %p208
      %p210 = pneg %p209
      // Predicated region
      $region33: #{tpu_custom_call.1} parent=5 // pred_check
        _
      $region34: #{tpu_custom_call.1} parent=5 // pred_check_branch
        %212 = sbr.rel (%p209) target = $region36
      $region35: #{tpu_custom_call.1} parent=5 // pred_region
        %s213 = ssub.s32 %s17, 1
        %s214 = sand.u32 %s30, 1
        %s215 = scalar_lea.sflag [#allocation3], %s214
        %s216 = sand.u32 %s30, 1
        %s217 = smul.addr %s216, 16
        %s218 = scalar_lea.vmem [#allocation2], %s217
        // Predicated region
        $region37: #{tpu_custom_call.1} parent=35 // pred_check
          %p219 = pneg %p43
        $region38: #{tpu_custom_call.1} parent=35 // pred_check_branch
          %221 = sbr.rel (%p219) target = $region40
        $region39: #{tpu_custom_call.1} parent=35 // pred_region
          %222 = dma.done %s215, 256
        $region40: #{tpu_custom_call.1} parent=35 // pred_fallthru
          _
        // Predicated region
        $region41: #{tpu_custom_call.1} parent=35 // pred_check
          %p223 = pneg %p64
        $region42: #{tpu_custom_call.1} parent=35 // pred_check_branch
          %225 = sbr.rel (%p223) target = $region44
        $region43: #{tpu_custom_call.1} parent=35 // pred_region
          %226 = dma.done [#allocation6], 2048
        $region44: #{tpu_custom_call.1} parent=35 // pred_fallthru
          _
        // Predicated region
        $region45: #{tpu_custom_call.1} parent=35 // pred_check
          %p227 = pneg %p85
        $region46: #{tpu_custom_call.1} parent=35 // pred_check_branch
          %229 = sbr.rel (%p227) target = $region48
        $region47: #{tpu_custom_call.1} parent=35 // pred_region
          %230 = dma.done [#allocation6], 2048
        $region48: #{tpu_custom_call.1} parent=35 // pred_fallthru
          _
        %s231 = sand.u32 %s30, 1
        %s232 = scalar_lea.sflag [#allocation3], %s231
        %s233 = sand.u32 %s30, 1
        %s234 = smul.addr %s233, 16
        %s235 = scalar_lea.vmem [#allocation2], %s234
        %p236 = pneg %p43
        %p237 = pneg %p40
        %p238 = pneg %p64
        %p239 = pneg %p61
        %p240 = pneg %p85
        %p241 = pneg %p82
        %p242 = pneg %p106
        %p243 = pneg %p103
        %p244 = pneg %p132
        %p245 = pneg %p129
        %s246 = sand.u32 %s119, 1
        %s247 = scalar_lea.sflag [#allocation4], %s246
        %s248 = sand.u32 %s119, 1
        %s249 = smul.addr %s248, 16
        %s250 = scalar_lea.vmem [#allocation8], %s249
        %s251 = smul.u32 2, %s22
        %s252 = ssub.s32 3, %s251
        %p253 = scmp.lt.s32.totalorder %s252, 2
        %s254 = scalar_select %p253, %s252, 2
        %s255 = smul.u32 128, %s254
        %s256 = smul.u32 2, %s22
        %s257 = ssub.s32 3, %s256
        %p258 = scmp.lt.s32.totalorder %s257, 2
        %s259 = scalar_select %p258, %s257, 2
        %s260 = smul.u32 128, %s259
        %v261 = vld [vmem:[%s218] sm:$0xff]
        %v262 = vld [vmem:[%s218 + $0x8] sm:$0xff]
        %v263 = vld [vmem:[#allocation5] sm:$0xff]
        %v264 = vld [vmem:[#allocation5 + $0x8] sm:$0xff]
        %v265 = vld [vmem:[#allocation5 + $0x10] sm:$0xff]
        %v266 = vld [vmem:[#allocation5 + $0x18] sm:$0xff]
        %v267 = vld [vmem:[#allocation5 + $0x20] sm:$0xff]
        %v268 = vld [vmem:[#allocation5 + $0x28] sm:$0xff]
        %v269 = vld [vmem:[#allocation5 + $0x30] sm:$0xff]
        %v270 = vld [vmem:[#allocation5 + $0x38] sm:$0xff]
        %v271 = vld [vmem:[#allocation5 + $0x40] sm:$0xff]
        %v272 = vld [vmem:[#allocation5 + $0x48] sm:$0xff]
        %v273 = vld [vmem:[#allocation5 + $0x50] sm:$0xff]
        %v274 = vld [vmem:[#allocation5 + $0x58] sm:$0xff]
        %v275 = vld [vmem:[#allocation5 + $0x60] sm:$0xff]
        %v276 = vld [vmem:[#allocation5 + $0x68] sm:$0xff]
        %v277 = vld [vmem:[#allocation5 + $0x70] sm:$0xff]
        %v278 = vld [vmem:[#allocation5 + $0x78] sm:$0xff]
        %v279 = vld [vmem:[%s3] sm:$0x1]
        %v280 = vlaneseq
        %v281 = vshrl.u32 %v280, 7
        %v282 = vsub.s32 0, %v281
        %v283 = vrot.slane %v279, %v282
        %284 = vmatprep.subr.mxu0 0.0
        %285 = vmatpush1.msra.mxu0 %v263
        %286 = vmatprep.subr.mxu0 0.0
        %287 = vmatpush1.msra.mxu0 %v264
        %288 = vmatprep.subr.mxu0 0.0
        %289 = vmatpush1.msra.mxu0 %v265
        %290 = vmatprep.subr.mxu0 0.0
        %291 = vmatpush1.msra.mxu0 %v266
        %292 = vmatprep.subr.mxu0 0.0
        %293 = vmatpush1.msra.mxu0 %v267
        %294 = vmatprep.subr.mxu0 0.0
        %295 = vmatpush1.msra.mxu0 %v268
        %296 = vmatprep.subr.mxu0 0.0
        %297 = vmatpush1.msra.mxu0 %v269
        %298 = vmatprep.subr.mxu0 0.0
        %299 = vmatpush1.msra.mxu0 %v270
        %300 = vmatprep.subr.mxu0 0.0
        %301 = vmatpush1.msra.mxu0 %v271
        %302 = vmatprep.subr.mxu0 0.0
        %303 = vmatpush1.msra.mxu0 %v272
        %304 = vmatprep.subr.mxu0 0.0
        %305 = vmatpush1.msra.mxu0 %v273
        %306 = vmatprep.subr.mxu0 0.0
        %307 = vmatpush1.msra.mxu0 %v274
        %308 = vmatprep.subr.mxu0 0.0
        %309 = vmatpush1.msra.mxu0 %v275
        %310 = vmatprep.subr.mxu0 0.0
        %311 = vmatpush1.msra.mxu0 %v276
        %312 = vmatprep.subr.mxu0 0.0
        %313 = vmatpush1.msra.mxu0 %v277
        %314 = vmatprep.subr.mxu0 0.0
        %315 = vmatpush1.msra.mxu0 %v278
        %316 = vmatprep.subr.mxu0 0.0
        %317 = vmatpush1.msra.mxu0 0.0
        %318 = vmatprep.subr.mxu0 0.0
        %319 = vmatpush1.msra.mxu0 0.0
        %320 = vmatprep.subr.mxu0 0.0
        %321 = vmatpush1.msra.mxu0 0.0
        %322 = vmatprep.subr.mxu0 0.0
        %323 = vmatpush1.msra.mxu0 0.0
        %324 = vmatprep.subr.mxu0 0.0
        %325 = vmatpush1.msra.mxu0 0.0
        %326 = vmatprep.subr.mxu0 0.0
        %327 = vmatpush1.msra.mxu0 0.0
        %328 = vmatprep.subr.mxu0 0.0
        %329 = vmatpush1.msra.mxu0 0.0
        %330 = vmatprep.subr.mxu0 0.0
        %331 = vmatpush1.msra.mxu0 0.0
        %332 = vmatprep.subr.mxu0 0.0
        %333 = vmatpush1.msra.mxu0 0.0
        %334 = vmatprep.subr.mxu0 0.0
        %335 = vmatpush1.msra.mxu0 0.0
        %336 = vmatprep.subr.mxu0 0.0
        %337 = vmatpush1.msra.mxu0 0.0
        %338 = vmatprep.subr.mxu0 0.0
        %339 = vmatpush1.msra.mxu0 0.0
        %340 = vmatprep.subr.mxu0 0.0
        %341 = vmatpush1.msra.mxu0 0.0
        %342 = vmatprep.subr.mxu0 0.0
        %343 = vmatpush1.msra.mxu0 0.0
        %344 = vmatprep.subr.mxu0 0.0
        %345 = vmatpush1.msra.mxu0 0.0
        %346 = vmatprep.subr.mxu0 0.0
        %347 = vmatpush1.msra.mxu0 0.0
        %348 = vmatprep.mubr.f32.mxu0 0.0
        %349 = vmatmul.mubr.f32.gmra.mrb[0].mxu0 %v261
        %v350 = vpop.f32.mrb[0].mxu0
        %v351 = vadd.f32 %v283, %v350
        %v352 = vpop.f32.mrb[0].mxu0
        %353 = vmatprep.mubr.f32.mxu0 0.0
        %354 = vmatmul.mubr.f32.gmra.mrb[0].mxu0 %v262
        %v355 = vpop.f32.mrb[0].mxu0
        %v356 = vadd.f32 %v283, %v355
        %v357 = vpop.f32.mrb[0].mxu0
        %358 = vdwg.mxu0
        %v359 = vmax.f32 %v351, 0.0
        %v360 = vmax.f32 %v356, 0.0
        %v361 = vld [vmem:[#allocation7] sm:$0xff]
        %v362 = vld [vmem:[#allocation7 + $0x8] sm:$0xff]
        %v363 = vld [vmem:[#allocation7 + $0x10] sm:$0xff]
        %v364 = vld [vmem:[#allocation7 + $0x18] sm:$0xff]
        %v365 = vld [vmem:[#allocation7 + $0x20] sm:$0xff]
        %v366 = vld [vmem:[#allocation7 + $0x28] sm:$0xff]
        %v367 = vld [vmem:[#allocation7 + $0x30] sm:$0xff]
        %v368 = vld [vmem:[#allocation7 + $0x38] sm:$0xff]
        %v369 = vld [vmem:[#allocation7 + $0x40] sm:$0xff]
        %v370 = vld [vmem:[#allocation7 + $0x48] sm:$0xff]
        %v371 = vld [vmem:[#allocation7 + $0x50] sm:$0xff]
        %v372 = vld [vmem:[#allocation7 + $0x58] sm:$0xff]
        %v373 = vld [vmem:[#allocation7 + $0x60] sm:$0xff]
        %v374 = vld [vmem:[#allocation7 + $0x68] sm:$0xff]
        %v375 = vld [vmem:[#allocation7 + $0x70] sm:$0xff]
        %v376 = vld [vmem:[#allocation7 + $0x78] sm:$0xff]
        %v377 = vld [vmem:[%s3 + $0x1] sm:$0x1]
        %v378 = vlaneseq
        %v379 = vshrl.u32 %v378, 7
        %v380 = vsub.s32 0, %v379
        %v381 = vrot.slane %v377, %v380
        %382 = vmatprep.subr.mxu0 0.0
        %383 = vmatpush1.msra.mxu0 %v361
        %384 = vmatprep.subr.mxu0 0.0
        %385 = vmatpush1.msra.mxu0 %v362
        %386 = vmatprep.subr.mxu0 0.0
        %387 = vmatpush1.msra.mxu0 %v363
        %388 = vmatprep.subr.mxu0 0.0
        %389 = vmatpush1.msra.mxu0 %v364
        %390 = vmatprep.subr.mxu0 0.0
        %391 = vmatpush1.msra.mxu0 %v365
        %392 = vmatprep.subr.mxu0 0.0
        %393 = vmatpush1.msra.mxu0 %v366
        %394 = vmatprep.subr.mxu0 0.0
        %395 = vmatpush1.msra.mxu0 %v367
        %396 = vmatprep.subr.mxu0 0.0
        %397 = vmatpush1.msra.mxu0 %v368
        %398 = vmatprep.subr.mxu0 0.0
        %399 = vmatpush1.msra.mxu0 %v369
        %400 = vmatprep.subr.mxu0 0.0
        %401 = vmatpush1.msra.mxu0 %v370
        %402 = vmatprep.subr.mxu0 0.0
        %403 = vmatpush1.msra.mxu0 %v371
        %404 = vmatprep.subr.mxu0 0.0
        %405 = vmatpush1.msra.mxu0 %v372
        %406 = vmatprep.subr.mxu0 0.0
        %407 = vmatpush1.msra.mxu0 %v373
        %408 = vmatprep.subr.mxu0 0.0
        %409 = vmatpush1.msra.mxu0 %v374
        %410 = vmatprep.subr.mxu0 0.0
        %411 = vmatpush1.msra.mxu0 %v375
        %412 = vmatprep.subr.mxu0 0.0
        %413 = vmatpush1.msra.mxu0 %v376
        %414 = vmatprep.subr.mxu0 0.0
        %415 = vmatpush1.msra.mxu0 0.0
        %416 = vmatprep.subr.mxu0 0.0
        %417 = vmatpush1.msra.mxu0 0.0
        %418 = vmatprep.subr.mxu0 0.0
        %419 = vmatpush1.msra.mxu0 0.0
        %420 = vmatprep.subr.mxu0 0.0
        %421 = vmatpush1.msra.mxu0 0.0
        %422 = vmatprep.subr.mxu0 0.0
        %423 = vmatpush1.msra.mxu0 0.0
        %424 = vmatprep.subr.mxu0 0.0
        %425 = vmatpush1.msra.mxu0 0.0
        %426 = vmatprep.subr.mxu0 0.0
        %427 = vmatpush1.msra.mxu0 0.0
        %428 = vmatprep.subr.mxu0 0.0
        %429 = vmatpush1.msra.mxu0 0.0
        %430 = vmatprep.subr.mxu0 0.0
        %431 = vmatpush1.msra.mxu0 0.0
        %432 = vmatprep.subr.mxu0 0.0
        %433 = vmatpush1.msra.mxu0 0.0
        %434 = vmatprep.subr.mxu0 0.0
        %435 = vmatpush1.msra.mxu0 0.0
        %436 = vmatprep.subr.mxu0 0.0
        %437 = vmatpush1.msra.mxu0 0.0
        %438 = vmatprep.subr.mxu0 0.0
        %439 = vmatpush1.msra.mxu0 0.0
        %440 = vmatprep.subr.mxu0 0.0
        %441 = vmatpush1.msra.mxu0 0.0
        %442 = vmatprep.subr.mxu0 0.0
        %443 = vmatpush1.msra.mxu0 0.0
        %444 = vmatprep.subr.mxu0 0.0
        %445 = vmatpush1.msra.mxu0 0.0
        %446 = vmatprep.mubr.f32.mxu0 0.0
        %447 = vmatmul.mubr.f32.gmra.mrb[0].mxu0 %v359
        %v448 = vpop.f32.mrb[0].mxu0
        %v449 = vadd.f32 %v381, %v448
        %v450 = vpop.f32.mrb[0].mxu0
        %451 = vmatprep.mubr.f32.mxu0 0.0
        %452 = vmatmul.mubr.f32.gmra.mrb[0].mxu0 %v360
        %v453 = vpop.f32.mrb[0].mxu0
        %v454 = vadd.f32 %v381, %v453
        %v455 = vpop.f32.mrb[0].mxu0
        %456 = vdwg.mxu0
        %v457 = vadd.f32 %v261, %v449
        %v458 = vadd.f32 %v262, %v454
        %v459 = vmax.f32 %v457, 0.0
        %v460 = vmax.f32 %v458, 0.0
        %461 = vst [vmem:[%s250] sm:$0xff] %v459
        %462 = vst [vmem:[%s250 + $0x8] sm:$0xff] %v460
        %s463 = sand.u32 %s119, 1
        %s464 = scalar_lea.sflag [#allocation4], %s463
        %s465 = sand.u32 %s119, 1
        %s466 = smul.addr %s465, 16
        %s467 = scalar_lea.vmem [#allocation8], %s466
        // Predicated region
        $region49: #{tpu_custom_call.1} parent=35 // pred_check
          %p468 = pneg %p129
        $region50: #{tpu_custom_call.1} parent=35 // pred_check_branch
          %470 = sbr.rel (%p468) target = $region52
        $region51: #{tpu_custom_call.1} parent=35 // pred_region
          %s471 = smul.u32 2, %s22
          %s472 = ssub.s32 3, %s471
          %p473 = scmp.lt.s32.totalorder %s472, 2
          %s474 = scalar_select %p473, %s472, 2
          %s475 = smul.u32 128, %s474
          %s477 = ssub.s32 256, %s475
          %478 = vsyncadd %s464, %s477
          %p479 = scmp.ne.s32.totalorder 0, %s475
          %s480 = smul.addr %s471, 128
          %s481 = scalar_lea.hbm %s4, %s480
          %s482 = smul.u32 8, %s474
          %s483 = sshll.u32 %s467, 4
          %s484 = int_to_ptr.vmem [resolvable:$true] %s483
          %s485 = sshll.u32 %s482, 4
          %489 = dma.vmem_to_hbm [thread:$0]  (%p479), %s484, %s485, %s481, %s464, 128, 128, 8
        $region52: #{tpu_custom_call.1} parent=35 // pred_fallthru
          _
      $region36: #{tpu_custom_call.1} parent=5 // pred_fallthru
        _
      %p490 = scmp.le.s32.totalorder 2, %s17
      // Predicated region
      $region53: #{tpu_custom_call.1} parent=5 // pred_check
        %p491 = pneg %p490
      $region54: #{tpu_custom_call.1} parent=5 // pred_check_branch
        %493 = sbr.rel (%p491) target = $region56
      $region55: #{tpu_custom_call.1} parent=5 // pred_region
        %s494 = ssub.s32 %s17, 2
        // Predicated region
        $region57: #{tpu_custom_call.1} parent=55 // pred_check
          %p495 = pneg %p135
        $region58: #{tpu_custom_call.1} parent=55 // pred_check_branch
          %497 = sbr.rel (%p495) target = $region60
        $region59: #{tpu_custom_call.1} parent=55 // pred_region
          %s498 = sand.u32 %s120, 1
          %s499 = scalar_lea.sflag [#allocation4], %s498
          %s500 = sand.u32 %s120, 1
          %s501 = smul.addr %s500, 16
          %s502 = scalar_lea.vmem [#allocation8], %s501
          %503 = dma.done %s499, 256
        $region60: #{tpu_custom_call.1} parent=55 // pred_fallthru
          _
      $region56: #{tpu_custom_call.1} parent=5 // pred_fallthru
        _
    $region6: #{tpu_custom_call.1} parent=1 // loop_footer
      %s21 = sadd.s32 1, %s17
    $region7: #{tpu_custom_call.1} parent=1 // loop_footer_branch
      %16 = sbr.rel target = $region3
    $region8: #{tpu_custom_call.1} parent=1 // loop_exit
      _
    %504 = vsyncpa [#allocation3], 1
    %s505 = scalar_lea.sflag [#allocation3], 1
    %506 = vsyncpa %s505, 1
    %507 = vsyncpa [#allocation6], 1
    %508 = vsyncpa [#allocation4], 1
    %s509 = scalar_lea.sflag [#allocation4], 1
    %510 = vsyncpa %s509, 1

</llo_original>
